<compile_context>
chip_gen: v7x
topology: tpu7x:2x2x1
jax: 0.10.0
libtpu: 0.0.40
codegen_flags: <defaults>
</compile_context>

<pallas_src>
import functools

import jax
import jax.numpy as jnp
from jax.experimental import pallas as pl
from jax.experimental.pallas import tpu as pltpu


def _bnneck_dropout_kernel(x_ref, x00_ref, gamma_ref, beta_ref, u_ref,
                           out_ref, sum_ref, sumsq_ref, *,
                           eps, dropout_rate, apply_dropout, inv_count):
    # grid = (c_block, n_batch, hw_block); (n, hw) are the reduction axes.
    n = pl.program_id(1)
    k = pl.program_id(2)

    @pl.when(jnp.logical_and(n == 0, k == 0))
    def _init():
        sum_ref[...] = jnp.zeros_like(sum_ref)
        sumsq_ref[...] = jnp.zeros_like(sumsq_ref)

    # Streaming one-pass statistics over this (c_blk, hw_blk) tile.
    xb = x_ref[0].astype(jnp.float32)                                 # (c_blk, hw_blk)
    sum_ref[...] += jnp.sum(xb, axis=-1, keepdims=True)               # (c_blk, 1)
    sumsq_ref[...] += jnp.sum(xb * xb, axis=-1, keepdims=True)        # (c_blk, 1)

    is_last = jnp.logical_and(n == pl.num_programs(1) - 1,
                              k == pl.num_programs(2) - 1)

    @pl.when(is_last)
    def _finalize():
        mean = sum_ref[...] * inv_count                               # (c_blk, 1)
        var = jnp.maximum(sumsq_ref[...] * inv_count - mean * mean, 0.0)  # biased
        inv_std = jax.lax.rsqrt(var + eps)                            # (c_blk, 1)

        # Normalize only the (0,0)-spatial columns (c_blk, N) + affine params.
        y = (x00_ref[...].astype(jnp.float32) - mean) * inv_std
        y = y * gamma_ref[...] + beta_ref[...]                        # (c_blk, N)

        if apply_dropout and dropout_rate > 0.0:
            keep = u_ref[...] >= jnp.float32(dropout_rate)
            y = jnp.where(keep, y * (1.0 / (1.0 - dropout_rate)),
                          jnp.zeros_like(y))

        out_ref[...] = y.astype(out_ref.dtype)


def _pick_block(dim, align, max_size):
    """Largest divisor of `dim` that is a multiple of `align` and <= max_size.
    Falls back to the full dimension (always a legal block size)."""
    for d in range(min(dim, max_size), align - 1, -1):
        if dim % d == 0 and d % align == 0:
            return d
    return dim


def bnneck_head_dropout(features, gamma, beta, *, dropout_rate=0.15,
                        eps=1e-5, rng_key=None, training=True):
    """features: (N, C, H, W) float32.  Returns (N, C) float32."""
    N, C, H, W = features.shape
    HW = H * W
    features = features.astype(jnp.float32)

    # Free view (no data movement): channels on sublanes, H*W on lanes.
    x3d = features.reshape(N, C, HW)
    # Tiny (N*C elements) gather of the (0,0) spatial slice, kept in (C, N)
    # layout so it matches the per-channel statistics layout in-kernel.
    x00 = jnp.transpose(features[:, :, 0, 0])                          # (C, N)
    gamma2d = gamma.reshape(C, 1).astype(jnp.float32)
    beta2d = beta.reshape(C, 1).astype(jnp.float32)

    if rng_key is None:
        rng_key = jax.random.PRNGKey(0)
    u = jax.random.uniform(rng_key, (C, N), dtype=jnp.float32)         # dropout draws

    # Tile selection: lane tile a multiple of 128 (or full HW), channel tile a
    # multiple of 8 (or full C), sized so one tile is ~<= 2 MiB. With double
    # buffering this stays far under v7x's 64 MiB VMEM.
    hw_blk = _pick_block(HW, 128, 2048)
    c_budget = max(8, (2 * 1024 * 1024) // (hw_blk * 4))
    c_blk = _pick_block(C, 8, c_budget)
    num_c = C // c_blk
    num_hw = HW // hw_blk
    grid = (num_c, N, num_hw)

    x_tile_bytes = c_blk * hw_blk * 4
    vmem_limit = int(min(48 * 1024 * 1024,                # leave headroom on v7x (64 MiB)
                         max(32 * 1024 * 1024, 4 * x_tile_bytes + 8 * 1024 * 1024)))

    kernel = functools.partial(
        _bnneck_dropout_kernel,
        eps=float(eps),
        dropout_rate=float(dropout_rate),
        apply_dropout=bool(training),
        inv_count=1.0 / float(N * HW),
    )

    out_cn = pl.pallas_call(
        kernel,
        out_shape=jax.ShapeDtypeStruct((C, N), jnp.float32),
        grid=grid,
        in_specs=[
            # Streaming input tiles: (1, c_blk, hw_blk) out of (N, C, HW).
            pl.BlockSpec((1, c_blk, hw_blk), lambda c, n, k: (n, c, k)),
            # (0,0)-slice, gamma, beta, dropout-uniforms: resident per c-block
            # (index depends only on c -> loaded once, not re-DMA'd each step).
            pl.BlockSpec((c_blk, N), lambda c, n, k: (c, 0)),
            pl.BlockSpec((c_blk, 1), lambda c, n, k: (c, 0)),
            pl.BlockSpec((c_blk, 1), lambda c, n, k: (c, 0)),
            pl.BlockSpec((c_blk, N), lambda c, n, k: (c, 0)),
        ],
        out_specs=pl.BlockSpec((c_blk, N), lambda c, n, k: (c, 0)),
        scratch_shapes=[
            pltpu.VMEM((c_blk, 1), jnp.float32),   # per-channel sum
            pltpu.VMEM((c_blk, 1), jnp.float32),   # per-channel sum of squares
        ],
        compiler_params=pltpu.CompilerParams(
            dimension_semantics=("parallel", "arbitrary", "arbitrary"),
            vmem_limit_bytes=vmem_limit,
        ),
    )(x3d, x00, gamma2d, beta2d, u)

    # Output is tiny (C*N elements): transposing it here is negligible HBM
    # traffic and avoids a sublane->lane relayout inside the kernel.
    return jnp.transpose(out_cn)                                       # (N, C)


def _reference_no_dropout(features, gamma, beta, eps=1e-5):
    """Pure-JAX reference of training-mode BatchNorm2d + [..., 0, 0] (no dropout)."""
    mean = jnp.mean(features, axis=(0, 2, 3))
    var = jnp.mean((features - mean[None, :, None, None]) ** 2, axis=(0, 2, 3))
    xn = (features - mean[None, :, None, None]) * jax.lax.rsqrt(
        var[None, :, None, None] + eps)
    y = xn * gamma[None, :, None, None] + beta[None, :, None, None]
    return y[:, :, 0, 0]


if __name__ == "__main__":
    # Small shapes consistent with the module: batch=2, in_feat=4, spatial=16x16.
    N, C, H, W = 2, 4, 16, 16
    dropout_rate = 0.15

    key = jax.random.PRNGKey(0)
    k_x, k_g, k_b, k_d = jax.random.split(key, 4)
    features = jax.random.normal(k_x, (N, C, H, W), dtype=jnp.float32)
    # BatchNorm2d defaults are weight=1, bias=0; perturb deterministically so
    # the affine path is exercised.
    gamma = 1.0 + 0.1 * jax.random.normal(k_g, (C,), dtype=jnp.float32)
    beta = 0.1 * jax.random.normal(k_b, (C,), dtype=jnp.float32)

    # Correctness check of the BN + slice hot path (dropout disabled).
    out_eval = bnneck_head_dropout(features, gamma, beta,
                                   dropout_rate=dropout_rate, training=False)
    out_eval = jax.block_until_ready(out_eval)
    ref = _reference_no_dropout(features, gamma, beta)
    assert out_eval.shape == (N, C)
    assert jnp.allclose(out_eval, ref, atol=1e-4, rtol=1e-4), (
        "kernel output does not match reference")

    # Full forward as in the module's default training mode (dropout active).
    out = bnneck_head_dropout(features, gamma, beta,
                              dropout_rate=dropout_rate, rng_key=k_d,
                              training=True)
    out = jax.block_until_ready(out)
    assert out.shape == (N, C)
    assert bool(jnp.all(jnp.isfinite(out)))

    print("KERNEL_OK")
</pallas_src>

<mosaic_0001>
module attributes {stable_mosaic.version = 11 : i64} {
  func.func @_bnneck_dropout_kernel(%arg0: i32, %arg1: i32, %arg2: i32, %arg3: memref<1x4x256xf32, #tpu.memory_space<vmem>>, %arg4: memref<4x2xf32, #tpu.memory_space<vmem>>, %arg5: memref<4x1xf32, #tpu.memory_space<vmem>>, %arg6: memref<4x1xf32, #tpu.memory_space<vmem>>, %arg7: memref<4x2xf32, #tpu.memory_space<vmem>>, %arg8: memref<4x2xf32, #tpu.memory_space<vmem>>, %arg9: memref<4x1xf32, #tpu.memory_space<vmem>>, %arg10: memref<4x1xf32, #tpu.memory_space<vmem>>) attributes {dimension_semantics = [#tpu.dimension_semantics<parallel>, #tpu.dimension_semantics<arbitrary>, #tpu.dimension_semantics<arbitrary>], iteration_bounds = array<i64: 1, 2, 1>, scalar_prefetch = 0 : i64, scratch_operands = 2 : i64, tpu.core_type = #tpu.core_type<tc>, window_params = [{transform_indices = @transform_0, window_bounds = array<i64: 1, 4, 256>}, {transform_indices = @transform_1, window_bounds = array<i64: 4, 2>}, {transform_indices = @transform_2, window_bounds = array<i64: 4, 1>}, {transform_indices = @transform_3, window_bounds = array<i64: 4, 1>}, {transform_indices = @transform_4, window_bounds = array<i64: 4, 2>}, {transform_indices = @transform_5, window_bounds = array<i64: 4, 2>}]} {
    %c0_i32 = arith.constant 0 : i32
    %0 = arith.cmpi eq, %arg1, %c0_i32 : i32
    %c0_i32_0 = arith.constant 0 : i32
    %1 = arith.cmpi eq, %arg2, %c0_i32_0 : i32
    %2 = arith.andi %0, %1 : i1
    %3 = arith.extui %2 : i1 to i32
    %c0_i32_1 = arith.constant 0 : i32
    %4 = arith.cmpi ne, %3, %c0_i32_1 : i32
    scf.if %4 {
      %cst_15 = arith.constant 0.000000e+00 : f32
      %23 = vector.broadcast %cst_15 : f32 to vector<4x1xf32>
      %c0_16 = arith.constant 0 : index
      %c0_17 = arith.constant 0 : index
      %24 = vector.load %arg9[%c0_16, %c0_17] : memref<4x1xf32, #tpu.memory_space<vmem>>, vector<4x1xf32>
      tpu.vector_store %arg9[%c0_16, %c0_17], %23 {strides = array<i32>} : memref<4x1xf32, #tpu.memory_space<vmem>>, vector<4x1xf32>,
      %cst_18 = arith.constant 0.000000e+00 : f32
      %25 = vector.broadcast %cst_18 : f32 to vector<4x1xf32>
      %c0_19 = arith.constant 0 : index
      %c0_20 = arith.constant 0 : index
      %26 = vector.load %arg10[%c0_19, %c0_20] : memref<4x1xf32, #tpu.memory_space<vmem>>, vector<4x1xf32>
      tpu.vector_store %arg10[%c0_19, %c0_20], %25 {strides = array<i32>} : memref<4x1xf32, #tpu.memory_space<vmem>>, vector<4x1xf32>,
    } else {
    }
    %c0 = arith.constant 0 : index
    %c0_2 = arith.constant 0 : index
    %c0_3 = arith.constant 0 : index
    %5 = vector.load %arg3[%c0, %c0_2, %c0_3] : memref<1x4x256xf32, #tpu.memory_space<vmem>>, vector<1x4x256xf32>
    %6 = vector.shape_cast %5 : vector<1x4x256xf32> to vector<4x256xf32>
    %c0_4 = arith.constant 0 : index
    %c0_5 = arith.constant 0 : index
    %7 = vector.load %arg9[%c0_4, %c0_5] : memref<4x1xf32, #tpu.memory_space<vmem>>, vector<4x1xf32>
    %cst = arith.constant dense<0.000000e+00> : vector<4xf32>
    %8 = vector.multi_reduction <add>, %6, %cst [1] : vector<4x256xf32> to vector<4xf32>
    %9 = vector.shape_cast %8 : vector<4xf32> to vector<4x1xf32>
    %10 = arith.addf %7, %9 : vector<4x1xf32>
    %c0_6 = arith.constant 0 : index
    %c0_7 = arith.constant 0 : index
    %11 = vector.load %arg9[%c0_6, %c0_7] : memref<4x1xf32, #tpu.memory_space<vmem>>, vector<4x1xf32>
    tpu.vector_store %arg9[%c0_6, %c0_7], %10 {strides = array<i32>} : memref<4x1xf32, #tpu.memory_space<vmem>>, vector<4x1xf32>,
    %c0_8 = arith.constant 0 : index
    %c0_9 = arith.constant 0 : index
    %12 = vector.load %arg10[%c0_8, %c0_9] : memref<4x1xf32, #tpu.memory_space<vmem>>, vector<4x1xf32>
    %13 = arith.mulf %6, %6 : vector<4x256xf32>
    %cst_10 = arith.constant dense<0.000000e+00> : vector<4xf32>
    %14 = vector.multi_reduction <add>, %13, %cst_10 [1] : vector<4x256xf32> to vector<4xf32>
    %15 = vector.shape_cast %14 : vector<4xf32> to vector<4x1xf32>
    %16 = arith.addf %12, %15 : vector<4x1xf32>
    %c0_11 = arith.constant 0 : index
    %c0_12 = arith.constant 0 : index
    %17 = vector.load %arg10[%c0_11, %c0_12] : memref<4x1xf32, #tpu.memory_space<vmem>>, vector<4x1xf32>
    tpu.vector_store %arg10[%c0_11, %c0_12], %16 {strides = array<i32>} : memref<4x1xf32, #tpu.memory_space<vmem>>, vector<4x1xf32>,
    %c1_i32 = arith.constant 1 : i32
    %18 = arith.cmpi eq, %arg1, %c1_i32 : i32
    %c0_i32_13 = arith.constant 0 : i32
    %19 = arith.cmpi eq, %arg2, %c0_i32_13 : i32
    %20 = arith.andi %18, %19 : i1
    %21 = arith.extui %20 : i1 to i32
    %c0_i32_14 = arith.constant 0 : i32
    %22 = arith.cmpi ne, %21, %c0_i32_14 : i32
    scf.if %22 {
      %c0_15 = arith.constant 0 : index
      %c0_16 = arith.constant 0 : index
      %23 = vector.load %arg9[%c0_15, %c0_16] : memref<4x1xf32, #tpu.memory_space<vmem>>, vector<4x1xf32>
      %cst_17 = arith.constant 0.001953125 : f32
      %24 = vector.broadcast %cst_17 : f32 to vector<4x1xf32>
      %25 = arith.mulf %23, %24 : vector<4x1xf32>
      %c0_18 = arith.constant 0 : index
      %c0_19 = arith.constant 0 : index
      %26 = vector.load %arg10[%c0_18, %c0_19] : memref<4x1xf32, #tpu.memory_space<vmem>>, vector<4x1xf32>
      %cst_20 = arith.constant 0.001953125 : f32
      %27 = vector.broadcast %cst_20 : f32 to vector<4x1xf32>
      %28 = arith.mulf %26, %27 : vector<4x1xf32>
      %29 = arith.mulf %25, %25 : vector<4x1xf32>
      %30 = arith.subf %28, %29 : vector<4x1xf32>
      %cst_21 = arith.constant 0.000000e+00 : f32
      %31 = vector.broadcast %cst_21 : f32 to vector<4x1xf32>
      %32 = arith.maximumf %30, %31 : vector<4x1xf32>
      %cst_22 = arith.constant 9.99999974E-6 : f32
      %33 = vector.broadcast %cst_22 : f32 to vector<4x1xf32>
      %34 = arith.addf %32, %33 : vector<4x1xf32>
      %35 = math.rsqrt %34 : vector<4x1xf32>
      %c0_23 = arith.constant 0 : index
      %c0_24 = arith.constant 0 : index
      %36 = vector.load %arg4[%c0_23, %c0_24] : memref<4x2xf32, #tpu.memory_space<vmem>>, vector<4x2xf32>
      %37 = vector.broadcast %25 : vector<4x1xf32> to vector<4x2xf32>
      %38 = arith.subf %36, %37 : vector<4x2xf32>
      %39 = vector.broadcast %35 : vector<4x1xf32> to vector<4x2xf32>
      %40 = arith.mulf %38, %39 : vector<4x2xf32>
      %c0_25 = arith.constant 0 : index
      %c0_26 = arith.constant 0 : index
      %41 = vector.load %arg5[%c0_25, %c0_26] : memref<4x1xf32, #tpu.memory_space<vmem>>, vector<4x1xf32>
      %42 = vector.broadcast %41 : vector<4x1xf32> to vector<4x2xf32>
      %43 = arith.mulf %40, %42 : vector<4x2xf32>
      %c0_27 = arith.constant 0 : index
      %c0_28 = arith.constant 0 : index
      %44 = vector.load %arg6[%c0_27, %c0_28] : memref<4x1xf32, #tpu.memory_space<vmem>>, vector<4x1xf32>
      %45 = vector.broadcast %44 : vector<4x1xf32> to vector<4x2xf32>
      %46 = arith.addf %43, %45 : vector<4x2xf32>
      %c0_29 = arith.constant 0 : index
      %c0_30 = arith.constant 0 : index
      %47 = vector.load %arg8[%c0_29, %c0_30] : memref<4x2xf32, #tpu.memory_space<vmem>>, vector<4x2xf32>
      tpu.vector_store %arg8[%c0_29, %c0_30], %46 {strides = array<i32>} : memref<4x2xf32, #tpu.memory_space<vmem>>, vector<4x2xf32>,
    } else {
    }
    return
  }
  func.func @transform_0(%arg0: i32, %arg1: i32, %arg2: i32) -> (i32, i32, i32) {
    %c0_i32 = arith.constant 0 : i32
    return %arg1, %arg0, %arg2 : i32, i32, i32
  }
  func.func @transform_1(%arg0: i32, %arg1: i32, %arg2: i32) -> (i32, i32) {
    %c0_i32 = arith.constant 0 : i32
    %c0_i32_0 = arith.constant 0 : i32
    return %arg0, %c0_i32 : i32, i32
  }
  func.func @transform_2(%arg0: i32, %arg1: i32, %arg2: i32) -> (i32, i32) {
    %c0_i32 = arith.constant 0 : i32
    %c0_i32_0 = arith.constant 0 : i32
    return %arg0, %c0_i32 : i32, i32
  }
  func.func @transform_3(%arg0: i32, %arg1: i32, %arg2: i32) -> (i32, i32) {
    %c0_i32 = arith.constant 0 : i32
    %c0_i32_0 = arith.constant 0 : i32
    return %arg0, %c0_i32 : i32, i32
  }
  func.func @transform_4(%arg0: i32, %arg1: i32, %arg2: i32) -> (i32, i32) {
    %c0_i32 = arith.constant 0 : i32
    %c0_i32_0 = arith.constant 0 : i32
    return %arg0, %c0_i32 : i32, i32
  }
  func.func @transform_5(%arg0: i32, %arg1: i32, %arg2: i32) -> (i32, i32) {
    %c0_i32 = arith.constant 0 : i32
    %c0_i32_0 = arith.constant 0 : i32
    return %arg0, %c0_i32 : i32, i32
  }
}

</mosaic_0001>

<llo_original>
// kernel: tpu_custom_call.1
$region0: #{tpu_custom_call.1}
  #allocation0 [shape = 'u32[]', space=smem, size = 0x4, offset = 0x4, fixed_abs, tag = 'smem constant byte address 0x4 - core index']
  #allocation1 [shape = 'u32[144,128]{1,0:T(1,128)}', space=vmem, size = 0x12000, scoped, tag = 'internal scratch']
  #allocation2 [shape = 'f32[4,1]{1,0:T(4,128)}', space=vmem, size = 0x800, scoped, tag = 'scratch operand']
  #allocation3 [shape = 'f32[4,1]{1,0:T(4,128)}', space=vmem, size = 0x800, scoped, tag = 'scratch operand']
  %s0 = inlined_call_operand.vmem [shape: f32[2,4,256], index: 0, kind: input, shape index: {}]
  %s1 = inlined_call_operand.vmem [shape: f32[4,2], index: 1, kind: input, shape index: {}]
  %s2 = inlined_call_operand.vmem [shape: f32[4,1], index: 2, kind: input, shape index: {}]
  %s3 = inlined_call_operand.vmem [shape: f32[4,1], index: 3, kind: input, shape index: {}]
  %s4 = inlined_call_operand.vmem [shape: f32[4,2], index: 4, kind: input, shape index: {}]
  %s5 = inlined_call_operand.vmem [shape: f32[4,2], index: 5, kind: output, shape index: {}]
  %s6 = sld [smem:[#allocation0]]
  $region61: #{tpu_custom_call.1} parent=0
    _
  %s8 = ssub.s32 1, %s6
  %s9 = scalar_select 0, %s8, %s6
  loop: start=0, step=1, limit=4
  $region2: #{tpu_custom_call.1} parent=0 // loop_pre_header
    _
  $region3: #{tpu_custom_call.1} parent=0 // loop_header
    %s11 = sphi 0, %s15
    %p12 = scmp.ge.s32.totalorder %s11, 4
    %s18 = sphi 0, %s37
    %s19 = sphi 0, %s33
    %s20 = sphi 0, %s29
    %s21 = sphi 0, %s18
    %s22 = sphi 0, %s19
    %s23 = sphi 0, %s20
    %s24 = sphi 0, %s21
    %s25 = sphi 0, %s22
    %s26 = sphi 0, %s23
    %s44 = sphi 0, %s46
    %s47 = sphi 0, %s44
    %s48 = sphi 0, %s47
    %s64 = sphi 0, %s48
    %s70 = sphi 0, %s72
    %s73 = sphi 0, %s70
    %s74 = sphi 0, %s73
    %s90 = sphi 0, %s74
    %s96 = sphi 0, %s98
    %s99 = sphi 0, %s96
    %s100 = sphi 0, %s99
    %s116 = sphi 0, %s100
    %s122 = sphi 0, %s124
    %s125 = sphi 0, %s122
    %s126 = sphi 0, %s125
    %s142 = sphi 0, %s126
    %s148 = sphi 0, %s150
    %s151 = sphi 0, %s148
    %s152 = sphi 0, %s151
    %s168 = sphi 0, %s152
    %s174 = sphi 0, %s176
    %s177 = sphi 0, %s174
    %s178 = sphi 0, %s177
    %s194 = sphi 0, %s178
  $region4: #{tpu_custom_call.1} parent=0 // loop_header_branch
    %14 = sbr.rel (%p12) target = $region8
  $region5: #{tpu_custom_call.1} parent=0 // loop_body
    %s16 = ssub.s32 %s11, 1
    %s17 = ssub.s32 %s11, 2
    %s27 = sadd.s32 1, %s20
    %p28 = scmp.ge.s32.totalorder %s27, 1
    %s29 = scalar_select %p28, 0, %s27
    %s30 = sadd.s32 1, %s19
    %s31 = scalar_select %p28, %s30, %s19
    %p32 = scmp.ge.s32.totalorder %s31, 2
    %s33 = scalar_select %p32, 0, %s31
    %s34 = sadd.s32 1, %s18
    %s35 = scalar_select %p32, %s34, %s18
    %p36 = scmp.ge.s32.totalorder %s35, 1
    %s37 = scalar_select %p36, 0, %s35
    %s38 = ssub.s32 %s19, %s33
    %s39 = ssub.s32 %s18, %s37
    %s40 = sor.u32 %s38, %s39
    %s41 = ssub.s32 %s20, %s29
    %s42 = sor.u32 %s40, %s41
    %p43 = scmp.eq.s32.totalorder %s42, 0
    %s45 = sadd.s32 %s44, 1
    %s46 = scalar_select %p43, %s44, %s45
    %p49 = pneg %p43
    %p50 = scmp.eq.s32.totalorder %s11, 1
    %p51 = por %p49, %p50
    %p52 = scmp.ne.s32.totalorder %s44, %s47
    %p53 = scmp.eq.s32.totalorder %s11, 0
    %p54 = por %p52, %p53
    %p55 = scmp.ne.s32.totalorder %s44, %s47
    %p56 = scmp.eq.s32.totalorder %s16, 1
    %p57 = por %p55, %p56
    %p58 = scmp.ne.s32.totalorder %s47, %s48
    %p59 = scmp.eq.s32.totalorder %s16, 0
    %p60 = por %p58, %p59
    %p61 = scmp.ne.s32.totalorder %s47, %s48
    %p62 = scmp.eq.s32.totalorder %s17, 1
    %p63 = por %p61, %p62
    %p65 = scmp.ne.s32.totalorder %s48, %s64
    %p66 = scmp.eq.s32.totalorder %s17, 0
    %p67 = por %p65, %p66
    %s68 = ssub.s32 %s18, %s37
    %p69 = scmp.eq.s32.totalorder %s68, 0
    %s71 = sadd.s32 %s70, 1
    %s72 = scalar_select %p69, %s70, %s71
    %p75 = pneg %p69
    %p76 = scmp.eq.s32.totalorder %s11, 1
    %p77 = por %p75, %p76
    %p78 = scmp.ne.s32.totalorder %s70, %s73
    %p79 = scmp.eq.s32.totalorder %s11, 0
    %p80 = por %p78, %p79
    %p81 = scmp.ne.s32.totalorder %s70, %s73
    %p82 = scmp.eq.s32.totalorder %s16, 1
    %p83 = por %p81, %p82
    %p84 = scmp.ne.s32.totalorder %s73, %s74
    %p85 = scmp.eq.s32.totalorder %s16, 0
    %p86 = por %p84, %p85
    %p87 = scmp.ne.s32.totalorder %s73, %s74
    %p88 = scmp.eq.s32.totalorder %s17, 1
    %p89 = por %p87, %p88
    %p91 = scmp.ne.s32.totalorder %s74, %s90
    %p92 = scmp.eq.s32.totalorder %s17, 0
    %p93 = por %p91, %p92
    %s94 = ssub.s32 %s18, %s37
    %p95 = scmp.eq.s32.totalorder %s94, 0
    %s97 = sadd.s32 %s96, 1
    %s98 = scalar_select %p95, %s96, %s97
    %p101 = pneg %p95
    %p102 = scmp.eq.s32.totalorder %s11, 1
    %p103 = por %p101, %p102
    %p104 = scmp.ne.s32.totalorder %s96, %s99
    %p105 = scmp.eq.s32.totalorder %s11, 0
    %p106 = por %p104, %p105
    %p107 = scmp.ne.s32.totalorder %s96, %s99
    %p108 = scmp.eq.s32.totalorder %s16, 1
    %p109 = por %p107, %p108
    %p110 = scmp.ne.s32.totalorder %s99, %s100
    %p111 = scmp.eq.s32.totalorder %s16, 0
    %p112 = por %p110, %p111
    %p113 = scmp.ne.s32.totalorder %s99, %s100
    %p114 = scmp.eq.s32.totalorder %s17, 1
    %p115 = por %p113, %p114
    %p117 = scmp.ne.s32.totalorder %s100, %s116
    %p118 = scmp.eq.s32.totalorder %s17, 0
    %p119 = por %p117, %p118
    %s120 = ssub.s32 %s18, %s37
    %p121 = scmp.eq.s32.totalorder %s120, 0
    %s123 = sadd.s32 %s122, 1
    %s124 = scalar_select %p121, %s122, %s123
    %p127 = pneg %p121
    %p128 = scmp.eq.s32.totalorder %s11, 1
    %p129 = por %p127, %p128
    %p130 = scmp.ne.s32.totalorder %s122, %s125
    %p131 = scmp.eq.s32.totalorder %s11, 0
    %p132 = por %p130, %p131
    %p133 = scmp.ne.s32.totalorder %s122, %s125
    %p134 = scmp.eq.s32.totalorder %s16, 1
    %p135 = por %p133, %p134
    %p136 = scmp.ne.s32.totalorder %s125, %s126
    %p137 = scmp.eq.s32.totalorder %s16, 0
    %p138 = por %p136, %p137
    %p139 = scmp.ne.s32.totalorder %s125, %s126
    %p140 = scmp.eq.s32.totalorder %s17, 1
    %p141 = por %p139, %p140
    %p143 = scmp.ne.s32.totalorder %s126, %s142
    %p144 = scmp.eq.s32.totalorder %s17, 0
    %p145 = por %p143, %p144
    %s146 = ssub.s32 %s18, %s37
    %p147 = scmp.eq.s32.totalorder %s146, 0
    %s149 = sadd.s32 %s148, 1
    %s150 = scalar_select %p147, %s148, %s149
    %p153 = pneg %p147
    %p154 = scmp.eq.s32.totalorder %s11, 1
    %p155 = por %p153, %p154
    %p156 = scmp.ne.s32.totalorder %s148, %s151
    %p157 = scmp.eq.s32.totalorder %s11, 0
    %p158 = por %p156, %p157
    %p159 = scmp.ne.s32.totalorder %s148, %s151
    %p160 = scmp.eq.s32.totalorder %s16, 1
    %p161 = por %p159, %p160
    %p162 = scmp.ne.s32.totalorder %s151, %s152
    %p163 = scmp.eq.s32.totalorder %s16, 0
    %p164 = por %p162, %p163
    %p165 = scmp.ne.s32.totalorder %s151, %s152
    %p166 = scmp.eq.s32.totalorder %s17, 1
    %p167 = por %p165, %p166
    %p169 = scmp.ne.s32.totalorder %s152, %s168
    %p170 = scmp.eq.s32.totalorder %s17, 0
    %p171 = por %p169, %p170
    %s172 = ssub.s32 %s18, %s37
    %p173 = scmp.eq.s32.totalorder %s172, 0
    %s175 = sadd.s32 %s174, 1
    %s176 = scalar_select %p173, %s174, %s175
    %p179 = pneg %p173
    %p180 = scmp.eq.s32.totalorder %s11, 1
    %p181 = por %p179, %p180
    %p182 = scmp.ne.s32.totalorder %s174, %s177
    %p183 = scmp.eq.s32.totalorder %s11, 0
    %p184 = por %p182, %p183
    %p185 = scmp.ne.s32.totalorder %s174, %s177
    %p186 = scmp.eq.s32.totalorder %s16, 1
    %p187 = por %p185, %p186
    %p188 = scmp.ne.s32.totalorder %s177, %s178
    %p189 = scmp.eq.s32.totalorder %s16, 0
    %p190 = por %p188, %p189
    %p191 = scmp.ne.s32.totalorder %s177, %s178
    %p192 = scmp.eq.s32.totalorder %s17, 1
    %p193 = por %p191, %p192
    %p195 = scmp.ne.s32.totalorder %s178, %s194
    %p196 = scmp.eq.s32.totalorder %s17, 0
    %p197 = por %p195, %p196
    %p198 = scmp.le.s32.totalorder 1, %s11
    %p199 = scmp.lt.s32.totalorder %s11, 3
    %p200 = pnand %p198, %p199
    %p201 = pneg %p200
    // Predicated region
    $region9: #{tpu_custom_call.1} parent=5 // pred_check
      _
    $region10: #{tpu_custom_call.1} parent=5 // pred_check_branch
      %203 = sbr.rel (%p200) target = $region12
    $region11: #{tpu_custom_call.1} parent=5 // pred_region
      %s204 = ssub.s32 %s11, 1
      // Predicated region
      $region13: #{tpu_custom_call.1} parent=11 // pred_check
        %p205 = pneg %p86
      $region14: #{tpu_custom_call.1} parent=11 // pred_check_branch
        %207 = sbr.rel (%p205) target = $region16
      $region15: #{tpu_custom_call.1} parent=11 // pred_region
        %p208 = scmp.lt.s32.totalorder %s21, 0
        %s209 = scalar_select %p208, %s21, 0
        %s210 = smul.addr %s209, 4
        %s211 = scalar_lea.vmem %s1, %s210
      $region16: #{tpu_custom_call.1} parent=11 // pred_fallthru
        _
      // Predicated region
      $region17: #{tpu_custom_call.1} parent=11 // pred_check
        %p212 = pneg %p112
      $region18: #{tpu_custom_call.1} parent=11 // pred_check_branch
        %214 = sbr.rel (%p212) target = $region20
      $region19: #{tpu_custom_call.1} parent=11 // pred_region
        %p215 = scmp.lt.s32.totalorder %s21, 0
        %s216 = scalar_select %p215, %s21, 0
        %s217 = smul.addr %s216, 4
        %s218 = scalar_lea.vmem %s2, %s217
      $region20: #{tpu_custom_call.1} parent=11 // pred_fallthru
        _
      // Predicated region
      $region21: #{tpu_custom_call.1} parent=11 // pred_check
        %p219 = pneg %p138
      $region22: #{tpu_custom_call.1} parent=11 // pred_check_branch
        %221 = sbr.rel (%p219) target = $region24
      $region23: #{tpu_custom_call.1} parent=11 // pred_region
        %p222 = scmp.lt.s32.totalorder %s21, 0
        %s223 = scalar_select %p222, %s21, 0
        %s224 = smul.addr %s223, 4
        %s225 = scalar_lea.vmem %s3, %s224
      $region24: #{tpu_custom_call.1} parent=11 // pred_fallthru
        _
      // Predicated region
      $region25: #{tpu_custom_call.1} parent=11 // pred_check
        %p226 = pneg %p164
      $region26: #{tpu_custom_call.1} parent=11 // pred_check_branch
        %228 = sbr.rel (%p226) target = $region28
      $region27: #{tpu_custom_call.1} parent=11 // pred_region
        %p229 = scmp.lt.s32.totalorder %s21, 0
        %s230 = scalar_select %p229, %s21, 0
        %s231 = smul.addr %s230, 4
        %s232 = scalar_lea.vmem %s4, %s231
      $region28: #{tpu_custom_call.1} parent=11 // pred_fallthru
        _
    $region12: #{tpu_custom_call.1} parent=5 // pred_fallthru
      _
    %p233 = scmp.lt.s32.totalorder %s11, 2
    // Predicated region
    $region29: #{tpu_custom_call.1} parent=5 // pred_check
      %p234 = pneg %p233
    $region30: #{tpu_custom_call.1} parent=5 // pred_check_branch
      %236 = sbr.rel (%p234) target = $region32
    $region31: #{tpu_custom_call.1} parent=5 // pred_region
      // Predicated region
      $region33: #{tpu_custom_call.1} parent=31 // pred_check
        %p237 = pneg %p54
      $region34: #{tpu_custom_call.1} parent=31 // pred_check_branch
        %239 = sbr.rel (%p237) target = $region36
      $region35: #{tpu_custom_call.1} parent=31 // pred_region
        %s240 = smul.u32 2, %s20
        %p241 = scmp.lt.s32.totalorder %s19, 1
        %s242 = scalar_select %p241, %s19, 1
        %p243 = scmp.lt.s32.totalorder %s18, 0
        %s244 = scalar_select %p243, %s18, 0
        %p245 = scmp.lt.s32.totalorder %s240, 1
        %s246 = scalar_select %p245, %s240, 1
        %s247 = smul.addr %s244, 2
        %s248 = sadd.s32 %s246, %s247
        %s249 = smul.addr %s242, 2
        %s250 = sadd.s32 %s248, %s249
        %s251 = smul.addr %s250, 4
        %s252 = scalar_lea.vmem %s0, %s251
        %s253 = smul.u32 2, %s20
      $region36: #{tpu_custom_call.1} parent=31 // pred_fallthru
        _
    $region32: #{tpu_custom_call.1} parent=5 // pred_fallthru
      _
    %p254 = scmp.le.s32.totalorder 1, %s11
    %p255 = scmp.lt.s32.totalorder %s11, 3
    %p256 = pnand %p254, %p255
    %p257 = pneg %p256
    // Predicated region
    $region37: #{tpu_custom_call.1} parent=5 // pred_check
      _
    $region38: #{tpu_custom_call.1} parent=5 // pred_check_branch
      %259 = sbr.rel (%p256) target = $region40
    $region39: #{tpu_custom_call.1} parent=5 // pred_region
      %s260 = ssub.s32 %s11, 1
      %s261 = smul.u32 2, %s23
      %p262 = scmp.lt.s32.totalorder %s22, 1
      %s263 = scalar_select %p262, %s22, 1
      %p264 = scmp.lt.s32.totalorder %s21, 0
      %s265 = scalar_select %p264, %s21, 0
      %p266 = scmp.lt.s32.totalorder %s261, 1
      %s267 = scalar_select %p266, %s261, 1
      %s268 = smul.addr %s265, 2
      %s269 = sadd.s32 %s267, %s268
      %s270 = smul.addr %s263, 2
      %s271 = sadd.s32 %s269, %s270
      %s272 = smul.addr %s271, 4
      %s273 = scalar_lea.vmem %s0, %s272
      %p274 = pneg %p60
      %p275 = pneg %p57
      %p276 = scmp.lt.s32.totalorder %s21, 0
      %s277 = scalar_select %p276, %s21, 0
      %s278 = smul.addr %s277, 4
      %s279 = scalar_lea.vmem %s1, %s278
      %p280 = pneg %p86
      %p281 = pneg %p83
      %p282 = scmp.lt.s32.totalorder %s21, 0
      %s283 = scalar_select %p282, %s21, 0
      %s284 = smul.addr %s283, 4
      %s285 = scalar_lea.vmem %s2, %s284
      %p286 = pneg %p112
      %p287 = pneg %p109
      %p288 = scmp.lt.s32.totalorder %s21, 0
      %s289 = scalar_select %p288, %s21, 0
      %s290 = smul.addr %s289, 4
      %s291 = scalar_lea.vmem %s3, %s290
      %p292 = pneg %p138
      %p293 = pneg %p135
      %p294 = scmp.lt.s32.totalorder %s21, 0
      %s295 = scalar_select %p294, %s21, 0
      %s296 = smul.addr %s295, 4
      %s297 = scalar_lea.vmem %s4, %s296
      %p298 = pneg %p164
      %p299 = pneg %p161
      %p300 = pneg %p190
      %p301 = pneg %p187
      %p302 = scmp.lt.s32.totalorder %s21, 0
      %s303 = scalar_select %p302, %s21, 0
      %s304 = smul.addr %s303, 4
      %s305 = scalar_lea.vmem %s5, %s304
      %s306 = smul.u32 2, %s23
      %p307 = scmp.lt.s32.totalorder %s22, 1
      %s308 = scalar_select %p307, %s22, 1
      %p309 = scmp.lt.s32.totalorder %s21, 0
      %s310 = scalar_select %p309, %s21, 0
      %p311 = scmp.lt.s32.totalorder %s306, 1
      %s312 = scalar_select %p311, %s306, 1
      %s313 = smul.addr %s310, 2
      %s314 = sadd.s32 %s312, %s313
      %s315 = smul.addr %s308, 2
      %s316 = sadd.s32 %s314, %s315
      %s317 = smul.addr %s316, 4
      %s318 = scalar_lea.vmem %s0, %s317
      %s319 = smul.u32 2, %s23
      %p320 = scmp.lt.s32.totalorder %s21, 0
      %s321 = scalar_select %p320, %s21, 0
      %s322 = smul.addr %s321, 4
      %s323 = scalar_lea.vmem %s1, %s322
      %p324 = scmp.lt.s32.totalorder %s21, 0
      %s325 = scalar_select %p324, %s21, 0
      %s326 = smul.addr %s325, 4
      %s327 = scalar_lea.vmem %s2, %s326
      %p328 = scmp.lt.s32.totalorder %s21, 0
      %s329 = scalar_select %p328, %s21, 0
      %s330 = smul.addr %s329, 4
      %s331 = scalar_lea.vmem %s3, %s330
      %p332 = scmp.lt.s32.totalorder %s21, 0
      %s333 = scalar_select %p332, %s21, 0
      %s334 = smul.addr %s333, 4
      %s335 = scalar_lea.vmem %s4, %s334
      %p336 = scmp.lt.s32.totalorder %s21, 0
      %s337 = scalar_select %p336, %s21, 0
      %s338 = smul.addr %s337, 4
      %s339 = scalar_lea.vmem %s5, %s338
      %p340 = scmp.eq.s32.totalorder %s22, 0
      %p341 = scmp.eq.s32.totalorder %s23, 0
      %p342 = pnand %p340, %p341
      %p343 = pneg %p342
      // Predicated region
      $region41: #{tpu_custom_call.1} parent=39 // pred_check
        _
      $region42: #{tpu_custom_call.1} parent=39 // pred_check_branch
        %345 = sbr.rel (%p342) target = $region44
      $region43: #{tpu_custom_call.1} parent=39 // pred_region
        %vm346 = vcmask 3072
        %347 = vst.msk [vmem:[#allocation2] sm:$0xf] %vm346, 0.0
        %348 = vst.msk [vmem:[#allocation3] sm:$0xf] %vm346, 0.0
      $region44: #{tpu_custom_call.1} parent=39 // pred_fallthru
        _
      %v349 = vld [vmem:[%s318] sm:$0xff]
      %v350 = vld [vmem:[#allocation2] sm:$0xf]
      %v352 = vcombine.high %v349, %v349
      %vm354 = vcmask 1043456
      %v355 = vsel %vm354, %v349, 0.0
      %v356 = vsel %vm354, %v352, 0.0
      %v357 = vadd.f32 %v355, %v356
      %358 = vadd.xlane.f32.xlu0 %v357
      %v359 = vpop.xlane.xlu0 %358
      %v360 = vadd.f32 %v350, %v359
      %vm361 = vcmask 3072
      %362 = vst.msk [vmem:[#allocation2] sm:$0xf] %vm361, %v360
      %v363 = vld [vmem:[#allocation3] sm:$0xf]
      %v364 = vmul.f32 %v349, %v349
      %v366 = vcombine.high %v364, %v364
      %v368 = vsel %vm354, %v364, 0.0
      %v369 = vsel %vm354, %v366, 0.0
      %v370 = vadd.f32 %v368, %v369
      %371 = vadd.xlane.f32.xlu0 %v370
      %v372 = vpop.xlane.xlu0 %371
      %v373 = vadd.f32 %v363, %v372
      %374 = vst.msk [vmem:[#allocation3] sm:$0xf] %vm361, %v373
      %p375 = scmp.eq.s32.totalorder %s22, 1
      %p376 = pnand %p375, %p341
      %p377 = pneg %p376
      // Predicated region
      $region45: #{tpu_custom_call.1} parent=39 // pred_check
        _
      $region46: #{tpu_custom_call.1} parent=39 // pred_check_branch
        %379 = sbr.rel (%p376) target = $region48
      $region47: #{tpu_custom_call.1} parent=39 // pred_region
        %v380 = vld [vmem:[#allocation2] sm:$0xf]
        %v381 = vmul.f32 %v380, 0.001953125
        %v382 = vld [vmem:[#allocation3] sm:$0xf]
        %v383 = vmul.f32 %v382, 0.001953125
        %v384 = vmul.f32 %v381, %v381
        %v385 = vsub.f32 %v383, %v384
        %v386 = vmax.f32 %v385, 0.0
        %v387 = vadd.f32 %v386, 1e-05
        %v388 = vrsqrt.pop %v387
        %v389 = vld [vmem:[%s323] sm:$0xf]
        %391 = vset.pattern.permute.xlu0 0
        %392 = vperm.xlu0 %391, %v381
        %v393 = vpop.permute.xlu0 %392
        %v395 = vsub.f32 %v389, %v393
        %397 = vset.pattern.permute.xlu0 0
        %398 = vperm.xlu0 %397, %v388
        %v399 = vpop.permute.xlu0 %398
        %v401 = vmul.f32 %v395, %v399
        %v402 = vld [vmem:[%s327] sm:$0xf]
        %404 = vset.pattern.permute.xlu0 0
        %405 = vperm.xlu0 %404, %v402
        %v406 = vpop.permute.xlu0 %405
        %v408 = vmul.f32 %v401, %v406
        %v409 = vld [vmem:[%s331] sm:$0xf]
        %411 = vset.pattern.permute.xlu0 0
        %412 = vperm.xlu0 %411, %v409
        %v413 = vpop.permute.xlu0 %412
        %v415 = vadd.f32 %v408, %v413
        %vm416 = vcmask 11264
        %417 = vst.msk [vmem:[%s339] sm:$0xf] %vm416, %v415
      $region48: #{tpu_custom_call.1} parent=39 // pred_fallthru
        _
      %p418 = scmp.lt.s32.totalorder %s21, 0
      %s419 = scalar_select %p418, %s21, 0
      %s420 = smul.addr %s419, 4
      %s421 = scalar_lea.vmem %s5, %s420
      // Predicated region
      $region49: #{tpu_custom_call.1} parent=39 // pred_check
        %p422 = pneg %p187
      $region50: #{tpu_custom_call.1} parent=39 // pred_check_branch
        %424 = sbr.rel (%p422) target = $region52
      $region51: #{tpu_custom_call.1} parent=39 // pred_region
        _
      $region52: #{tpu_custom_call.1} parent=39 // pred_fallthru
        _
      // Predicated region
      $region53: #{tpu_custom_call.1} parent=39 // pred_check
        %p425 = pneg %p187
      $region54: #{tpu_custom_call.1} parent=39 // pred_check_branch
        %427 = sbr.rel (%p425) target = $region56
      $region55: #{tpu_custom_call.1} parent=39 // pred_region
        %p428 = scmp.lt.s32.totalorder %s21, 0
        %s429 = scalar_select %p428, %s21, 0
        %s430 = smul.addr %s429, 4
        %s431 = scalar_lea.vmem %s5, %s430
      $region56: #{tpu_custom_call.1} parent=39 // pred_fallthru
        _
    $region40: #{tpu_custom_call.1} parent=5 // pred_fallthru
      _
    %p432 = scmp.le.s32.totalorder 2, %s11
    // Predicated region
    $region57: #{tpu_custom_call.1} parent=5 // pred_check
      %p433 = pneg %p432
    $region58: #{tpu_custom_call.1} parent=5 // pred_check_branch
      %435 = sbr.rel (%p433) target = $region60
    $region59: #{tpu_custom_call.1} parent=5 // pred_region
      %s436 = ssub.s32 %s11, 2
    $region60: #{tpu_custom_call.1} parent=5 // pred_fallthru
      _
  $region6: #{tpu_custom_call.1} parent=0 // loop_footer
    %s15 = sadd.s32 1, %s11
  $region7: #{tpu_custom_call.1} parent=0 // loop_footer_branch
    %10 = sbr.rel target = $region3
  $region8: #{tpu_custom_call.1} parent=0 // loop_exit
    _

</llo_original>
